<compile_context>
chip_gen: v5e
topology: v5e:2x2
jax: 0.10.0
libtpu: 0.0.40
codegen_flags: <defaults>
</compile_context>

<pallas_src>
import jax
import jax.numpy as jnp
from jax import lax
from jax.experimental import pallas as pl
from jax.experimental.pallas import tpu as pltpu


def mymodel_kernel(x_ref, a_ref, b_ref, c_ref, d_ref,
                   w1_ref, b1_ref, w2_ref, b2_ref, o_ref):
    f32 = jnp.float32

    # x-independent weight updates first (independent MXU work; natural
    # lhs-last / rhs-first contraction -> no transposes needed).
    mw1 = w1_ref[...] + jnp.dot(a_ref[...], b_ref[...],
                                preferred_element_type=f32)
    mw2 = w2_ref[...] + jnp.dot(c_ref[...], d_ref[...],
                                preferred_element_type=f32)

    # Linear layers: contract last dim of the activation with last dim of the
    # (out_features, in_features) weight -> equivalent to x @ W.T without
    # materializing a transpose in VMEM.
    contract_last = (((1,), (1,)), ((), ()))
    h = lax.dot_general(x_ref[...], mw1, contract_last,
                        preferred_element_type=f32) + b1_ref[...]
    y = lax.dot_general(h, mw2, contract_last,
                        preferred_element_type=f32) + b2_ref[...]

    o_ref[...] = y.astype(o_ref.dtype)


@jax.jit
def mymodel_forward(x, A, B, C, D, W1, b1, W2, b2):
    n_batch, _ = x.shape
    n_out = W2.shape[0]

    # Biases as (1, out) rows so they map cleanly onto the lane axis and
    # broadcast against the (batch, out) activations inside the kernel.
    b1r = b1.reshape(1, -1)
    b2r = b2.reshape(1, -1)

    vmem_spec = pl.BlockSpec(memory_space=pltpu.MemorySpace.VMEM)
    return pl.pallas_call(
        mymodel_kernel,
        out_shape=jax.ShapeDtypeStruct((n_batch, n_out), x.dtype),
        in_specs=[vmem_spec] * 9,
        out_specs=vmem_spec,
    )(x, A, B, C, D, W1, b1r, W2, b2r)


def reference_forward(x, A, B, C, D, W1, b1, W2, b2):
    mw1 = W1 + A @ B
    mw2 = W2 + C @ D
    h = x @ mw1.T + b1
    return h @ mw2.T + b2


if __name__ == "__main__":
    key = jax.random.PRNGKey(0)
    keys = jax.random.split(key, 9)

    # Input: (10, 10) * 0.01 as in the PyTorch script.
    x = jax.random.normal(keys[0], (10, 10), dtype=jnp.float32) * 0.01

    # Deterministic parameter init (synthetic; shapes from __init__).
    A = jax.random.normal(keys[1], (10, 10), dtype=jnp.float32)
    B = jax.random.normal(keys[2], (10, 10), dtype=jnp.float32)
    C = jax.random.normal(keys[3], (10, 10), dtype=jnp.float32)
    D = jax.random.normal(keys[4], (10, 10), dtype=jnp.float32)
    # nn.Linear(10, 10): weight (out, in), bias (out,), U(-1/sqrt(10), 1/sqrt(10))
    bound = 1.0 / jnp.sqrt(10.0)
    W1 = jax.random.uniform(keys[5], (10, 10), jnp.float32, -bound, bound)
    b1 = jax.random.uniform(keys[6], (10,), jnp.float32, -bound, bound)
    W2 = jax.random.uniform(keys[7], (10, 10), jnp.float32, -bound, bound)
    b2 = jax.random.uniform(keys[8], (10,), jnp.float32, -bound, bound)

    out = mymodel_forward(x, A, B, C, D, W1, b1, W2, b2)
    out = jax.block_until_ready(out)

    ref = reference_forward(x, A, B, C, D, W1, b1, W2, b2)
    assert out.shape == (10, 10)
    assert jnp.allclose(out, ref, atol=1e-4, rtol=1e-4), "mismatch vs JAX reference"

    print("KERNEL_OK")
</pallas_src>

<mosaic_0001>
module attributes {stable_mosaic.version = 11 : i64} {
  func.func @mymodel_kernel(%arg0: memref<10x10xf32, #tpu.memory_space<vmem>>, %arg1: memref<10x10xf32, #tpu.memory_space<vmem>>, %arg2: memref<10x10xf32, #tpu.memory_space<vmem>>, %arg3: memref<10x10xf32, #tpu.memory_space<vmem>>, %arg4: memref<10x10xf32, #tpu.memory_space<vmem>>, %arg5: memref<10x10xf32, #tpu.memory_space<vmem>>, %arg6: memref<1x10xf32, #tpu.memory_space<vmem>>, %arg7: memref<10x10xf32, #tpu.memory_space<vmem>>, %arg8: memref<1x10xf32, #tpu.memory_space<vmem>>, %arg9: memref<10x10xf32, #tpu.memory_space<vmem>>) attributes {dimension_semantics = [], scalar_prefetch = 0 : i64, scratch_operands = 0 : i64, tpu.core_type = #tpu.core_type<tc>} {
    %c0 = arith.constant 0 : index
    %c0_0 = arith.constant 0 : index
    %0 = vector.load %arg5[%c0, %c0_0] : memref<10x10xf32, #tpu.memory_space<vmem>>, vector<10x10xf32>
    %c0_1 = arith.constant 0 : index
    %c0_2 = arith.constant 0 : index
    %1 = vector.load %arg1[%c0_1, %c0_2] : memref<10x10xf32, #tpu.memory_space<vmem>>, vector<10x10xf32>
    %c0_3 = arith.constant 0 : index
    %c0_4 = arith.constant 0 : index
    %2 = vector.load %arg2[%c0_3, %c0_4] : memref<10x10xf32, #tpu.memory_space<vmem>>, vector<10x10xf32>
    %cst = arith.constant dense<0.000000e+00> : vector<10x10xf32>
    %3 = tpu.matmul %1, %2, %cst {dimension_numbers = #tpu.dot_dimension_numbers<[1], [0], [0], [1], [0, 0, 1, 1], [], []>} : vector<10x10xf32>, vector<10x10xf32>, vector<10x10xf32> -> vector<10x10xf32>
    %4 = arith.addf %0, %3 : vector<10x10xf32>
    %c0_5 = arith.constant 0 : index
    %c0_6 = arith.constant 0 : index
    %5 = vector.load %arg7[%c0_5, %c0_6] : memref<10x10xf32, #tpu.memory_space<vmem>>, vector<10x10xf32>
    %c0_7 = arith.constant 0 : index
    %c0_8 = arith.constant 0 : index
    %6 = vector.load %arg3[%c0_7, %c0_8] : memref<10x10xf32, #tpu.memory_space<vmem>>, vector<10x10xf32>
    %c0_9 = arith.constant 0 : index
    %c0_10 = arith.constant 0 : index
    %7 = vector.load %arg4[%c0_9, %c0_10] : memref<10x10xf32, #tpu.memory_space<vmem>>, vector<10x10xf32>
    %cst_11 = arith.constant dense<0.000000e+00> : vector<10x10xf32>
    %8 = tpu.matmul %6, %7, %cst_11 {dimension_numbers = #tpu.dot_dimension_numbers<[1], [0], [0], [1], [0, 0, 1, 1], [], []>} : vector<10x10xf32>, vector<10x10xf32>, vector<10x10xf32> -> vector<10x10xf32>
    %9 = arith.addf %5, %8 : vector<10x10xf32>
    %c0_12 = arith.constant 0 : index
    %c0_13 = arith.constant 0 : index
    %10 = vector.load %arg0[%c0_12, %c0_13] : memref<10x10xf32, #tpu.memory_space<vmem>>, vector<10x10xf32>
    %cst_14 = arith.constant dense<0.000000e+00> : vector<10x10xf32>
    %11 = tpu.matmul %10, %4, %cst_14 {dimension_numbers = #tpu.dot_dimension_numbers<[1], [1], [0], [0], [0, 0, 1, 0], [], []>} : vector<10x10xf32>, vector<10x10xf32>, vector<10x10xf32> -> vector<10x10xf32>
    %c0_15 = arith.constant 0 : index
    %c0_16 = arith.constant 0 : index
    %12 = vector.load %arg6[%c0_15, %c0_16] : memref<1x10xf32, #tpu.memory_space<vmem>>, vector<1x10xf32>
    %13 = vector.broadcast %12 : vector<1x10xf32> to vector<10x10xf32>
    %14 = arith.addf %11, %13 : vector<10x10xf32>
    %cst_17 = arith.constant dense<0.000000e+00> : vector<10x10xf32>
    %15 = tpu.matmul %14, %9, %cst_17 {dimension_numbers = #tpu.dot_dimension_numbers<[1], [1], [0], [0], [0, 0, 1, 0], [], []>} : vector<10x10xf32>, vector<10x10xf32>, vector<10x10xf32> -> vector<10x10xf32>
    %c0_18 = arith.constant 0 : index
    %c0_19 = arith.constant 0 : index
    %16 = vector.load %arg8[%c0_18, %c0_19] : memref<1x10xf32, #tpu.memory_space<vmem>>, vector<1x10xf32>
    %17 = vector.broadcast %16 : vector<1x10xf32> to vector<10x10xf32>
    %18 = arith.addf %15, %17 : vector<10x10xf32>
    %c0_20 = arith.constant 0 : index
    %c0_21 = arith.constant 0 : index
    %19 = vector.load %arg9[%c0_20, %c0_21] : memref<10x10xf32, #tpu.memory_space<vmem>>, vector<10x10xf32>
    tpu.vector_store %arg9[%c0_20, %c0_21], %18 {strides = array<i32>} : memref<10x10xf32, #tpu.memory_space<vmem>>, vector<10x10xf32>,
    return
  }
}

</mosaic_0001>

<llo_original>
// kernel: mymodel_forward.1
$region0: #{mymodel_forward.1}
  #allocation0 [shape = 'u32[]', space=smem, size = 0x4, offset = 0x4, fixed_abs, tag = 'smem constant byte address 0x4 - core index']
  #allocation1 [shape = 'u32[72,128]{1,0:T(1,128)}', space=vmem, size = 0x9000, scoped, tag = 'internal scratch']
  %s0 = inlined_call_operand.hbm [shape: f32[10,10], index: 0, kind: input, shape index: {}]
  %s1 = inlined_call_operand.hbm [shape: f32[10,10], index: 1, kind: input, shape index: {}]
  %s2 = inlined_call_operand.hbm [shape: f32[10,10], index: 2, kind: input, shape index: {}]
  %s3 = inlined_call_operand.hbm [shape: f32[10,10], index: 3, kind: input, shape index: {}]
  %s4 = inlined_call_operand.hbm [shape: f32[10,10], index: 4, kind: input, shape index: {}]
  %s5 = inlined_call_operand.hbm [shape: f32[10,10], index: 5, kind: input, shape index: {}]
  %s6 = inlined_call_operand.vmem [shape: f32[1,10], index: 6, kind: input, shape index: {}]
  %s7 = inlined_call_operand.hbm [shape: f32[10,10], index: 7, kind: input, shape index: {}]
  %s8 = inlined_call_operand.vmem [shape: f32[1,10], index: 8, kind: input, shape index: {}]
  %s9 = inlined_call_operand.hbm [shape: f32[10,10], index: 9, kind: output, shape index: {}]
  %s10 = sld [smem:[#allocation0]]
  $region74: #{mymodel_forward.1} parent=0
    _
  %s12 = ssub.s32 1, %s10
  %s13 = scalar_select 0, %s12, %s10
  $region1: #{mymodel_forward.1} parent=0
    #allocation2 [shape = 'u8[8192]{0}', space=vmem, size = 0x2000, scoped, tag = 'input window, operand 0, single buffered']
    #allocation3 [shape = 's32[1]{0}', space=sflag, size = 0x4, scoped, tag = 'scoped memory for mymodel_forward.1']
    #allocation4 [shape = 's32[1]{0}', space=sflag, size = 0x4, scoped, tag = 'scoped memory for mymodel_forward.1']
    #allocation5 [shape = 'u8[8192]{0}', space=vmem, size = 0x2000, scoped, tag = 'input window, operand 1, single buffered']
    #allocation6 [shape = 's32[1]{0}', space=sflag, size = 0x4, scoped, tag = 'scoped memory for mymodel_forward.1']
    #allocation7 [shape = 'u8[8192]{0}', space=vmem, size = 0x2000, scoped, tag = 'input window, operand 2, single buffered']
    #allocation8 [shape = 'u8[8192]{0}', space=vmem, size = 0x2000, scoped, tag = 'input window, operand 3, single buffered']
    #allocation9 [shape = 's32[1]{0}', space=sflag, size = 0x4, scoped, tag = 'scoped memory for mymodel_forward.1']
    #allocation10 [shape = 'u8[8192]{0}', space=vmem, size = 0x2000, scoped, tag = 'input window, operand 4, single buffered']
    #allocation11 [shape = 'u8[8192]{0}', space=vmem, size = 0x2000, scoped, tag = 'input window, operand 5, single buffered']
    #allocation12 [shape = 's32[1]{0}', space=sflag, size = 0x4, scoped, tag = 'scoped memory for mymodel_forward.1']
    #allocation13 [shape = 'u8[8192]{0}', space=vmem, size = 0x2000, scoped, tag = 'input window, operand 7, single buffered']
    #allocation14 [shape = 'u8[8192]{0}', space=vmem, size = 0x2000, scoped, tag = 'output window, operand 0, single buffered']
    %14 = vsyncpa [#allocation3], 0
    %15 = vsyncpa [#allocation6], 0
    %16 = vsyncpa [#allocation9], 0
    %17 = vsyncpa [#allocation12], 0
    %18 = vsyncpa [#allocation4], 0
    // Predicated region
    $region2: #{mymodel_forward.1} parent=1 // pred_check
      _
    $region3: #{mymodel_forward.1} parent=1 // pred_check_branch
      %20 = sbr.rel (0) target = $region5
    $region4: #{mymodel_forward.1} parent=1 // pred_region
      %22 = vsyncadd [#allocation3], 0
      %s23 = sshll.u32 %s0, 4
      %s24 = int_to_ptr.hbm [resolvable:$true] %s23
      %s25 = sshll.u32 [#allocation2], 4
      %s26 = int_to_ptr.vmem [resolvable:$true] %s25
      %31 = dma.hbm_to_vmem [thread:$0]  %s24, 256, %s26, [#allocation3], 128, 128, 8
    $region5: #{mymodel_forward.1} parent=1 // pred_fallthru
      _
    // Predicated region
    $region6: #{mymodel_forward.1} parent=1 // pred_check
      _
    $region7: #{mymodel_forward.1} parent=1 // pred_check_branch
      %33 = sbr.rel (0) target = $region9
    $region8: #{mymodel_forward.1} parent=1 // pred_region
      %35 = vsyncadd [#allocation6], 0
      %s36 = sshll.u32 %s1, 4
      %s37 = int_to_ptr.hbm [resolvable:$true] %s36
      %s38 = sshll.u32 [#allocation5], 4
      %s39 = int_to_ptr.vmem [resolvable:$true] %s38
      %44 = dma.hbm_to_vmem [thread:$0]  %s37, 256, %s39, [#allocation6], 128, 128, 8
    $region9: #{mymodel_forward.1} parent=1 // pred_fallthru
      _
    // Predicated region
    $region10: #{mymodel_forward.1} parent=1 // pred_check
      _
    $region11: #{mymodel_forward.1} parent=1 // pred_check_branch
      %46 = sbr.rel (0) target = $region13
    $region12: #{mymodel_forward.1} parent=1 // pred_region
      %48 = vsyncadd [#allocation6], 0
      %s49 = sshll.u32 %s2, 4
      %s50 = int_to_ptr.hbm [resolvable:$true] %s49
      %s51 = sshll.u32 [#allocation7], 4
      %s52 = int_to_ptr.vmem [resolvable:$true] %s51
      %57 = dma.hbm_to_vmem [thread:$0]  %s50, 256, %s52, [#allocation6], 128, 128, 8
    $region13: #{mymodel_forward.1} parent=1 // pred_fallthru
      _
    // Predicated region
    $region14: #{mymodel_forward.1} parent=1 // pred_check
      _
    $region15: #{mymodel_forward.1} parent=1 // pred_check_branch
      %59 = sbr.rel (0) target = $region17
    $region16: #{mymodel_forward.1} parent=1 // pred_region
      %61 = vsyncadd [#allocation9], 0
      %s62 = sshll.u32 %s3, 4
      %s63 = int_to_ptr.hbm [resolvable:$true] %s62
      %s64 = sshll.u32 [#allocation8], 4
      %s65 = int_to_ptr.vmem [resolvable:$true] %s64
      %70 = dma.hbm_to_vmem [thread:$0]  %s63, 256, %s65, [#allocation9], 128, 128, 8
    $region17: #{mymodel_forward.1} parent=1 // pred_fallthru
      _
    // Predicated region
    $region18: #{mymodel_forward.1} parent=1 // pred_check
      _
    $region19: #{mymodel_forward.1} parent=1 // pred_check_branch
      %72 = sbr.rel (0) target = $region21
    $region20: #{mymodel_forward.1} parent=1 // pred_region
      %74 = vsyncadd [#allocation9], 0
      %s75 = sshll.u32 %s4, 4
      %s76 = int_to_ptr.hbm [resolvable:$true] %s75
      %s77 = sshll.u32 [#allocation10], 4
      %s78 = int_to_ptr.vmem [resolvable:$true] %s77
      %83 = dma.hbm_to_vmem [thread:$0]  %s76, 256, %s78, [#allocation9], 128, 128, 8
    $region21: #{mymodel_forward.1} parent=1 // pred_fallthru
      _
    // Predicated region
    $region22: #{mymodel_forward.1} parent=1 // pred_check
      _
    $region23: #{mymodel_forward.1} parent=1 // pred_check_branch
      %85 = sbr.rel (0) target = $region25
    $region24: #{mymodel_forward.1} parent=1 // pred_region
      %87 = vsyncadd [#allocation12], 0
      %s88 = sshll.u32 %s5, 4
      %s89 = int_to_ptr.hbm [resolvable:$true] %s88
      %s90 = sshll.u32 [#allocation11], 4
      %s91 = int_to_ptr.vmem [resolvable:$true] %s90
      %96 = dma.hbm_to_vmem [thread:$0]  %s89, 256, %s91, [#allocation12], 128, 128, 8
    $region25: #{mymodel_forward.1} parent=1 // pred_fallthru
      _
    // Predicated region
    $region26: #{mymodel_forward.1} parent=1 // pred_check
      _
    $region27: #{mymodel_forward.1} parent=1 // pred_check_branch
      %98 = sbr.rel (0) target = $region29
    $region28: #{mymodel_forward.1} parent=1 // pred_region
      _
    $region29: #{mymodel_forward.1} parent=1 // pred_fallthru
      _
    // Predicated region
    $region30: #{mymodel_forward.1} parent=1 // pred_check
      _
    $region31: #{mymodel_forward.1} parent=1 // pred_check_branch
      %100 = sbr.rel (0) target = $region33
    $region32: #{mymodel_forward.1} parent=1 // pred_region
      %102 = vsyncadd [#allocation12], 0
      %s103 = sshll.u32 %s7, 4
      %s104 = int_to_ptr.hbm [resolvable:$true] %s103
      %s105 = sshll.u32 [#allocation13], 4
      %s106 = int_to_ptr.vmem [resolvable:$true] %s105
      %111 = dma.hbm_to_vmem [thread:$0]  %s104, 256, %s106, [#allocation12], 128, 128, 8
    $region33: #{mymodel_forward.1} parent=1 // pred_fallthru
      _
    // Predicated region
    $region34: #{mymodel_forward.1} parent=1 // pred_check
      _
    $region35: #{mymodel_forward.1} parent=1 // pred_check_branch
      %113 = sbr.rel (0) target = $region37
    $region36: #{mymodel_forward.1} parent=1 // pred_region
      _
    $region37: #{mymodel_forward.1} parent=1 // pred_fallthru
      _
    // Predicated region
    $region38: #{mymodel_forward.1} parent=1 // pred_check
      _
    $region39: #{mymodel_forward.1} parent=1 // pred_check_branch
      %115 = sbr.rel (0) target = $region41
    $region40: #{mymodel_forward.1} parent=1 // pred_region
      %117 = dma.done [#allocation3], 256
    $region41: #{mymodel_forward.1} parent=1 // pred_fallthru
      _
    // Predicated region
    $region42: #{mymodel_forward.1} parent=1 // pred_check
      _
    $region43: #{mymodel_forward.1} parent=1 // pred_check_branch
      %119 = sbr.rel (0) target = $region45
    $region44: #{mymodel_forward.1} parent=1 // pred_region
      %121 = dma.done [#allocation6], 256
    $region45: #{mymodel_forward.1} parent=1 // pred_fallthru
      _
    // Predicated region
    $region46: #{mymodel_forward.1} parent=1 // pred_check
      _
    $region47: #{mymodel_forward.1} parent=1 // pred_check_branch
      %123 = sbr.rel (0) target = $region49
    $region48: #{mymodel_forward.1} parent=1 // pred_region
      %125 = dma.done [#allocation6], 256
    $region49: #{mymodel_forward.1} parent=1 // pred_fallthru
      _
    // Predicated region
    $region50: #{mymodel_forward.1} parent=1 // pred_check
      _
    $region51: #{mymodel_forward.1} parent=1 // pred_check_branch
      %127 = sbr.rel (0) target = $region53
    $region52: #{mymodel_forward.1} parent=1 // pred_region
      %129 = dma.done [#allocation9], 256
    $region53: #{mymodel_forward.1} parent=1 // pred_fallthru
      _
    // Predicated region
    $region54: #{mymodel_forward.1} parent=1 // pred_check
      _
    $region55: #{mymodel_forward.1} parent=1 // pred_check_branch
      %131 = sbr.rel (0) target = $region57
    $region56: #{mymodel_forward.1} parent=1 // pred_region
      %133 = dma.done [#allocation9], 256
    $region57: #{mymodel_forward.1} parent=1 // pred_fallthru
      _
    // Predicated region
    $region58: #{mymodel_forward.1} parent=1 // pred_check
      _
    $region59: #{mymodel_forward.1} parent=1 // pred_check_branch
      %135 = sbr.rel (0) target = $region61
    $region60: #{mymodel_forward.1} parent=1 // pred_region
      %137 = dma.done [#allocation12], 256
    $region61: #{mymodel_forward.1} parent=1 // pred_fallthru
      _
    // Predicated region
    $region62: #{mymodel_forward.1} parent=1 // pred_check
      _
    $region63: #{mymodel_forward.1} parent=1 // pred_check_branch
      %139 = sbr.rel (0) target = $region65
    $region64: #{mymodel_forward.1} parent=1 // pred_region
      %141 = dma.done [#allocation12], 256
    $region65: #{mymodel_forward.1} parent=1 // pred_fallthru
      _
    %v142 = vld [vmem:[#allocation11] sm:$0xff]
    %v143 = vld [vmem:[#allocation11 + $0x8] sm:$0x3]
    %v144 = vld [vmem:[#allocation5] sm:$0xff]
    %v145 = vld [vmem:[#allocation5 + $0x8] sm:$0x3]
    %v146 = vld [vmem:[#allocation7] sm:$0xff]
    %v147 = vld [vmem:[#allocation7 + $0x8] sm:$0x3]
    %vm148 = vcmask 80896
    %v150 = vsel %vm148, %v144, 0
    %v153 = vsel %vm148, %v145, 0
    %vm155 = vcmask 1041408
    %v157 = vsel %vm155, %v147, 0
    %159 = vmatpush.msra.mxu0 0.0
    %160 = vmatpush.msra.mxu0 0.0
    %161 = vmatpush.msra.mxu0 0.0
    %162 = vmatpush.msra.mxu0 0.0
    %163 = vmatpush.msra.mxu0 0.0
    %164 = vmatpush.msra.mxu0 0.0
    %165 = vmatpush.msra.mxu0 0.0
    %166 = vmatpush.msra.mxu0 0.0
    %167 = vmatpush.msra.mxu0 0.0
    %168 = vmatpush.msra.mxu0 0.0
    %169 = vmatpush.msra.mxu0 0.0
    %170 = vmatpush.msra.mxu0 0.0
    %171 = vmatpush.msra.mxu0 0.0
    %172 = vmatpush.msra.mxu0 0.0
    %173 = vmatpush.msra.mxu0 %v157
    %174 = vmatpush.msra.mxu0 %v146
    %175 = vmatmul.f32.gmra.mxu0 %v150
    %v176 = vpop.f32.mrf.mxu0
    %v177 = vadd.f32 0.0, %v176
    %178 = vmatmul.f32.gmra.mxu0 %v153
    %v179 = vpop.f32.mrf.mxu0
    %v180 = vadd.f32 0.0, %v179
    %181 = vdwg.mxu0
    %v182 = vadd.f32 %v142, %v177
    %v183 = vadd.f32 %v143, %v180
    %v184 = vld [vmem:[#allocation13] sm:$0xff]
    %v185 = vld [vmem:[#allocation13 + $0x8] sm:$0x3]
    %v186 = vld [vmem:[#allocation8] sm:$0xff]
    %v187 = vld [vmem:[#allocation8 + $0x8] sm:$0x3]
    %v188 = vld [vmem:[#allocation10] sm:$0xff]
    %v189 = vld [vmem:[#allocation10 + $0x8] sm:$0x3]
    %v191 = vsel %vm148, %v186, 0
    %v194 = vsel %vm148, %v187, 0
    %v197 = vsel %vm155, %v189, 0
    %199 = vmatpush.msra.mxu0 0.0
    %200 = vmatpush.msra.mxu0 0.0
    %201 = vmatpush.msra.mxu0 0.0
    %202 = vmatpush.msra.mxu0 0.0
    %203 = vmatpush.msra.mxu0 0.0
    %204 = vmatpush.msra.mxu0 0.0
    %205 = vmatpush.msra.mxu0 0.0
    %206 = vmatpush.msra.mxu0 0.0
    %207 = vmatpush.msra.mxu0 0.0
    %208 = vmatpush.msra.mxu0 0.0
    %209 = vmatpush.msra.mxu0 0.0
    %210 = vmatpush.msra.mxu0 0.0
    %211 = vmatpush.msra.mxu0 0.0
    %212 = vmatpush.msra.mxu0 0.0
    %213 = vmatpush.msra.mxu0 %v197
    %214 = vmatpush.msra.mxu0 %v188
    %215 = vmatmul.f32.gmra.mxu0 %v191
    %v216 = vpop.f32.mrf.mxu0
    %v217 = vadd.f32 0.0, %v216
    %218 = vmatmul.f32.gmra.mxu0 %v194
    %v219 = vpop.f32.mrf.mxu0
    %v220 = vadd.f32 0.0, %v219
    %221 = vdwg.mxu0
    %v222 = vadd.f32 %v184, %v217
    %v223 = vadd.f32 %v185, %v220
    %v224 = vld [vmem:[#allocation2] sm:$0xff]
    %v225 = vld [vmem:[#allocation2 + $0x8] sm:$0x3]
    %v226 = vld [vmem:[%s6] sm:$0x1]
    %v228 = vperm.slane %v226, 0
    %v231 = vsel %vm148, %v224, 0
    %v234 = vsel %vm148, %v225, 0
    %v237 = vsel %vm148, %v182, 0
    %v240 = vsel %vm148, %v183, 0
    %242 = vmatpush.xpose.msra.mxu0 0.0
    %243 = vmatpush.xpose.msra.mxu0 0.0
    %244 = vmatpush.xpose.msra.mxu0 0.0
    %245 = vmatpush.xpose.msra.mxu0 0.0
    %246 = vmatpush.xpose.msra.mxu0 0.0
    %247 = vmatpush.xpose.msra.mxu0 0.0
    %248 = vmatpush.xpose.msra.mxu0 0.0
    %249 = vmatpush.xpose.msra.mxu0 0.0
    %250 = vmatpush.xpose.msra.mxu0 0.0
    %251 = vmatpush.xpose.msra.mxu0 0.0
    %252 = vmatpush.xpose.msra.mxu0 0.0
    %253 = vmatpush.xpose.msra.mxu0 0.0
    %254 = vmatpush.xpose.msra.mxu0 0.0
    %255 = vmatpush.xpose.msra.mxu0 0.0
    %256 = vmatpush.xpose.msra.mxu0 %v240
    %257 = vmatpush.xpose.msra.mxu0 %v237
    %258 = vmatmul.f32.gmra.mxu0 %v231
    %v259 = vpop.f32.mrf.mxu0
    %v260 = vadd.f32 %v228, %v259
    %261 = vmatmul.f32.gmra.mxu0 %v234
    %v262 = vpop.f32.mrf.mxu0
    %v263 = vadd.f32 %v228, %v262
    %264 = vdwg.mxu0
    %v265 = vld [vmem:[%s8] sm:$0x1]
    %v267 = vperm.slane %v265, 0
    %v270 = vsel %vm148, %v260, 0
    %v273 = vsel %vm148, %v263, 0
    %v276 = vsel %vm148, %v222, 0
    %v279 = vsel %vm148, %v223, 0
    %281 = vmatpush.xpose.msra.mxu0 0.0
    %282 = vmatpush.xpose.msra.mxu0 0.0
    %283 = vmatpush.xpose.msra.mxu0 0.0
    %284 = vmatpush.xpose.msra.mxu0 0.0
    %285 = vmatpush.xpose.msra.mxu0 0.0
    %286 = vmatpush.xpose.msra.mxu0 0.0
    %287 = vmatpush.xpose.msra.mxu0 0.0
    %288 = vmatpush.xpose.msra.mxu0 0.0
    %289 = vmatpush.xpose.msra.mxu0 0.0
    %290 = vmatpush.xpose.msra.mxu0 0.0
    %291 = vmatpush.xpose.msra.mxu0 0.0
    %292 = vmatpush.xpose.msra.mxu0 0.0
    %293 = vmatpush.xpose.msra.mxu0 0.0
    %294 = vmatpush.xpose.msra.mxu0 0.0
    %295 = vmatpush.xpose.msra.mxu0 %v279
    %296 = vmatpush.xpose.msra.mxu0 %v276
    %297 = vmatmul.f32.gmra.mxu0 %v270
    %v298 = vpop.f32.mrf.mxu0
    %v299 = vadd.f32 %v267, %v298
    %300 = vmatmul.f32.gmra.mxu0 %v273
    %v301 = vpop.f32.mrf.mxu0
    %v302 = vadd.f32 %v267, %v301
    %303 = vdwg.mxu0
    %304 = vst.msk [vmem:[#allocation14] sm:$0xff] %vm148, %v299
    %vm305 = vcmask 74752
    %306 = vst.msk [vmem:[#allocation14 + $0x8] sm:$0x3] %vm305, %v302
    // Predicated region
    $region66: #{mymodel_forward.1} parent=1 // pred_check
      _
    $region67: #{mymodel_forward.1} parent=1 // pred_check_branch
      %308 = sbr.rel (0) target = $region69
    $region68: #{mymodel_forward.1} parent=1 // pred_region
      %310 = vsyncadd [#allocation4], 0
      %s311 = sshll.u32 [#allocation14], 4
      %s312 = int_to_ptr.vmem [resolvable:$true] %s311
      %s313 = sshll.u32 %s9, 4
      %s314 = int_to_ptr.hbm [resolvable:$true] %s313
      %319 = dma.vmem_to_hbm [thread:$0]  %s312, 256, %s314, [#allocation4], 128, 128, 8
    $region69: #{mymodel_forward.1} parent=1 // pred_fallthru
      _
    // Predicated region
    $region70: #{mymodel_forward.1} parent=1 // pred_check
      _
    $region71: #{mymodel_forward.1} parent=1 // pred_check_branch
      %321 = sbr.rel (0) target = $region73
    $region72: #{mymodel_forward.1} parent=1 // pred_region
      %323 = dma.done [#allocation4], 256
    $region73: #{mymodel_forward.1} parent=1 // pred_fallthru
      _
    %324 = vsyncpa [#allocation3], 1
    %325 = vsyncpa [#allocation6], 1
    %326 = vsyncpa [#allocation9], 1
    %327 = vsyncpa [#allocation12], 1
    %328 = vsyncpa [#allocation4], 1

</llo_original>
